<compile_context>
chip_gen: v7x
topology: tpu7x:2x2x1
jax: 0.10.0
libtpu: 0.0.40
codegen_flags: <defaults>
</compile_context>

<pallas_src>
import functools
import math

import jax
import jax.numpy as jnp
from jax import lax
from jax.experimental import pallas as pl
from jax.experimental.pallas import tpu as pltpu

_LANE = 128
_SUBLANE = 8
_CHUNK_ROWS = 1024                      # in-kernel processing chunk (0.5 MiB f32)
_FUSED_MAX_BLOCK_ROWS = 2048            # 1 MiB f32 per input block (fused path)
_TWO_PASS_BLOCK_ROWS = 8192             # 4 MiB f32 per input block (two-pass path)
_FUSED_STORE_MAX_BYTES = 12 * 1024 * 1024   # f32 diff store budget for the fused path
_VMEM_LIMIT_BYTES = 32 * 1024 * 1024        # safe on v5e/v6e (128 MiB) and v7x (64 MiB)


def _round_up(x, m):
    return ((x + m - 1) // m) * m


def _cdiv(a, b):
    return -(-a // b)


def _berhu_parts(diff, delta):
    """part1/part2 numerators with the exact (strict) torch predicates."""
    part1 = jnp.where(diff < delta, diff, 0.0)          # diff where diff < delta
    d2 = diff * diff
    part2 = jnp.where(d2 > delta * delta, d2, 0.0)      # diff^2 where diff^2 > delta^2
    return part1, part2


def _diff_chunks(real_ref, fake_ref, tm, chunk, base_row, rows, masked):
    """Yield (start, size, f32 diff chunk) covering a (tm, 128) block of the refs.

    Static 1024-row slices keep Mosaic temporaries small even with 8192-row
    DMA blocks. `masked` zeroes rows >= rows (edge / overrun blocks only).
    """
    for start in range(0, tm, chunk):
        size = min(chunk, tm - start)
        real = real_ref[start:start + size, :].astype(jnp.float32)
        fake = fake_ref[start:start + size, :].astype(jnp.float32)
        fake = jnp.where(real > 0.0, fake, 0.0)          # fake * (real > 0)
        diff = jnp.abs(real - fake)
        if masked:
            rid = lax.broadcasted_iota(jnp.int32, (size, _LANE), 0) + (base_row + start)
            diff = jnp.where(rid < rows, diff, 0.0)
        yield start, size, diff


# ---------------------------------------------------------------------------
# Fused single-pass kernel (small tensors): one HBM read, delta via SMEM scratch
# ---------------------------------------------------------------------------
def _make_fused_kernel(tm, rows, nb, needs_mask, threshold):
    chunk = min(_CHUNK_ROWS, tm)

    def kernel(tail_max_ref, real_ref, fake_ref, out_ref,
               diff_store, max_acc, lin_acc, quad_acc, delta_sm):
        p = pl.program_id(0)   # phase: 0 = max, 1 = sums
        i = pl.program_id(1)   # block

        @pl.when((p == 0) & (i == 0))
        def _():
            max_acc[...] = jnp.zeros_like(max_acc)       # diff >= 0, so 0 is safe
            lin_acc[...] = jnp.zeros_like(lin_acc)
            quad_acc[...] = jnp.zeros_like(quad_acc)

        # ---- phase 0: stream block from HBM once, stash diff, track global max
        @pl.when(p == 0)
        def _():
            base = i * tm

            def process(masked):
                for start, size, diff in _diff_chunks(real_ref, fake_ref, tm, chunk,
                                                      base, rows, masked):
                    off = pl.multiple_of(base + start, _SUBLANE)
                    diff_store[pl.ds(off, size), :] = diff
                    blk_max = diff.reshape(size // _SUBLANE, _SUBLANE, _LANE).max(axis=0)
                    max_acc[...] = jnp.maximum(max_acc[...], blk_max)

            if needs_mask:
                edge = (i + 1) * tm > rows               # only the last block is ragged
                @pl.when(jnp.logical_not(edge))
                def _():
                    process(False)
                @pl.when(edge)
                def _():
                    process(True)
            else:
                process(False)

            @pl.when(i == nb - 1)
            def _():
                m = jnp.maximum(jnp.max(max_acc[...]), tail_max_ref[0, 0])
                delta_sm[0] = jnp.float32(threshold) * m

        # ---- phase 1: BerHu sums from the VMEM-resident diff (no HBM traffic)
        @pl.when(p == 1)
        def _():
            delta = delta_sm[0]
            base = i * tm
            for start in range(0, tm, chunk):
                size = min(chunk, tm - start)
                off = pl.multiple_of(base + start, _SUBLANE)
                diff = diff_store[pl.ds(off, size), :]
                part1, part2 = _berhu_parts(diff, delta)
                lin_acc[...] += part1.reshape(size // _SUBLANE, _SUBLANE, _LANE).sum(axis=0)
                quad_acc[...] += part2.reshape(size // _SUBLANE, _SUBLANE, _LANE).sum(axis=0)

            @pl.when(i == nb - 1)
            def _():
                out_ref[0, 0] = delta_sm[0]
                out_ref[0, 1] = jnp.sum(lin_acc[...])
                out_ref[0, 2] = jnp.sum(quad_acc[...])

    return kernel


# ---------------------------------------------------------------------------
# Two-pass kernels (large tensors): grid (2, nbh) -> both v7x TensorCores
# ---------------------------------------------------------------------------
def _make_max_kernel(tm, rows, nbh, needs_mask):
    chunk = min(_CHUNK_ROWS, tm)

    def kernel(real_ref, fake_ref, out_ref, max_acc):
        c = pl.program_id(0)               # core half (parallel)
        i = pl.program_id(1)               # block within the half (arbitrary)

        @pl.when(i == 0)
        def _():
            max_acc[...] = jnp.zeros_like(max_acc)

        lb = c * nbh + i                   # logical block id (may overrun on core 1)

        def process(masked):
            for _, size, diff in _diff_chunks(real_ref, fake_ref, tm, chunk,
                                              lb * tm, rows, masked):
                blk_max = diff.reshape(size // _SUBLANE, _SUBLANE, _LANE).max(axis=0)
                max_acc[...] = jnp.maximum(max_acc[...], blk_max)

        if needs_mask:
            edge = (lb + 1) * tm > rows    # ragged last block or fully-overrun block
            @pl.when(jnp.logical_not(edge))
            def _():
                process(False)
            @pl.when(edge)
            def _():
                process(True)
        else:
            process(False)

        @pl.when(i == nbh - 1)
        def _():
            out_ref[0, 0] = jnp.max(max_acc[...])   # one per-core row

    return kernel


def _make_sum_kernel(tm, rows, nbh, needs_mask):
    chunk = min(_CHUNK_ROWS, tm)

    def kernel(delta_ref, real_ref, fake_ref, out_ref, lin_acc, quad_acc):
        c = pl.program_id(0)
        i = pl.program_id(1)

        @pl.when(i == 0)
        def _():
            lin_acc[...] = jnp.zeros_like(lin_acc)
            quad_acc[...] = jnp.zeros_like(quad_acc)

        delta = delta_ref[0, 0]
        lb = c * nbh + i

        def process(masked):
            for _, size, diff in _diff_chunks(real_ref, fake_ref, tm, chunk,
                                              lb * tm, rows, masked):
                part1, part2 = _berhu_parts(diff, delta)
                lin_acc[...] += part1.reshape(size // _SUBLANE, _SUBLANE, _LANE).sum(axis=0)
                quad_acc[...] += part2.reshape(size // _SUBLANE, _SUBLANE, _LANE).sum(axis=0)

        if needs_mask:
            edge = (lb + 1) * tm > rows
            @pl.when(jnp.logical_not(edge))
            def _():
                process(False)
            @pl.when(edge)
            def _():
                process(True)
        else:
            process(False)

        @pl.when(i == nbh - 1)
        def _():
            out_ref[0, 0] = jnp.sum(lin_acc[...])
            out_ref[0, 1] = jnp.sum(quad_acc[...])

    return kernel


# ---------------------------------------------------------------------------
# Plain-JAX glue: separable bilinear resize (two MXU matmuls, no gathers)
# ---------------------------------------------------------------------------
# TODO(synk): the align_corners=True resize stays in XLA (dense matmuls on the
# MXU) rather than a dedicated Pallas kernel.
def _interp_matrix(in_size, out_size):
    """(out_size, in_size) weights of 1-D linear interpolation, align_corners=True."""
    if out_size == 1 or in_size == 1:
        w = jnp.zeros((out_size, in_size), jnp.float32)
        return w.at[:, 0].set(1.0)
    src = jnp.arange(out_size, dtype=jnp.float32) * ((in_size - 1) / (out_size - 1))
    i0 = jnp.clip(jnp.floor(src).astype(jnp.int32), 0, in_size - 1)
    i1 = jnp.clip(i0 + 1, 0, in_size - 1)
    frac = src - i0.astype(jnp.float32)
    cols = jnp.arange(in_size, dtype=jnp.int32)[None, :]
    w = ((1.0 - frac)[:, None] * (cols == i0[:, None]).astype(jnp.float32)
         + frac[:, None] * (cols == i1[:, None]).astype(jnp.float32))
    return w


def _resize_bilinear_align_corners(x, out_h, out_w):
    """F.interpolate(x, size=(out_h, out_w), mode='bilinear', align_corners=True)."""
    _, _, h, w = x.shape
    wy = _interp_matrix(h, out_h)                      # (out_h, h)
    wx = _interp_matrix(w, out_w)                      # (out_w, w)
    xf = x.astype(jnp.float32)
    t = jnp.einsum('oh,nchw->ncow', wy, xf, precision=jax.lax.Precision.HIGHEST)
    y = jnp.einsum('ncow,pw->ncop', t, wx, precision=jax.lax.Precision.HIGHEST)
    return y


# ---------------------------------------------------------------------------
# Public entry point
# ---------------------------------------------------------------------------
@functools.partial(jax.jit, static_argnames=("threshold", "force_two_pass"))
def berhu_loss(real, fake, threshold=0.2, force_two_pass=False):
    """Equivalent of BerHu(threshold).forward(real, fake)."""
    if fake.shape != real.shape:
        _, _, H, W = real.shape
        # cast back to the input dtype so HBM read traffic stays halved for bf16 callers
        fake = _resize_bilinear_align_corners(fake, H, W).astype(fake.dtype)

    n_elem = math.prod(real.shape)
    rows = n_elem // _LANE
    tail = n_elem - rows * _LANE

    real_flat = real.reshape(-1)
    fake_flat = fake.reshape(-1)

    # Lane-ragged tail (< 128 elements): tiny plain-JAX computation, no jnp.pad.
    if tail:
        t_real = real_flat[rows * _LANE:].astype(jnp.float32)
        t_fake = fake_flat[rows * _LANE:].astype(jnp.float32)
        t_fake = jnp.where(t_real > 0.0, t_fake, 0.0)
        t_diff = jnp.abs(t_real - t_fake)
        tail_max = jnp.max(t_diff)
    else:
        t_diff = None
        tail_max = jnp.zeros((), jnp.float32)

    if rows == 0:  # degenerate: everything lives in the tail
        delta = jnp.float32(threshold) * tail_max
        p1, p2 = _berhu_parts(t_diff, delta)
        return (jnp.sum(p1) + jnp.sum(p2) / (2.0 * delta)).astype(jnp.float32)

    # Lane-dense (rows, 128) view. A free bitcast when n % 128 == 0 (common NCHW
    # case); with a ragged tail XLA may materialize the prefix slice once.
    real2d = real_flat[: rows * _LANE].reshape(rows, _LANE)
    fake2d = fake_flat[: rows * _LANE].reshape(rows, _LANE)
    hbm_bytes = rows * _LANE * (real2d.dtype.itemsize + fake2d.dtype.itemsize)

    use_fused = (not force_two_pass) and (rows * _LANE * 4 <= _FUSED_STORE_MAX_BYTES)

    if use_fused:
        # ---------------- fused single-pass: HBM read once ----------------
        tm = min(_FUSED_MAX_BLOCK_ROWS, _round_up(rows, _SUBLANE))
        nb = _cdiv(rows, tm)
        needs_mask = nb * tm != rows
        # phase 0 walks the blocks; phase 1 pins the index so no re-DMA happens
        blk = pl.BlockSpec((tm, _LANE), lambda p, i: (i * (1 - p) + (nb - 1) * p, 0))

        out = pl.pallas_call(
            _make_fused_kernel(tm, rows, nb, needs_mask, float(threshold)),
            out_shape=jax.ShapeDtypeStruct((1, 3), jnp.float32),
            grid_spec=pltpu.PrefetchScalarGridSpec(
                num_scalar_prefetch=0,
                grid=(2, nb),
                in_specs=[
                    pl.BlockSpec((1, 1), lambda p, i: (0, 0), memory_space=pltpu.SMEM),
                    blk, blk,
                ],
                out_specs=pl.BlockSpec((1, 3), lambda p, i: (0, 0),
                                       memory_space=pltpu.SMEM),
                scratch_shapes=[
                    pltpu.VMEM((nb * tm, _LANE), jnp.float32),      # resident diff
                    pltpu.VMEM((_SUBLANE, _LANE), jnp.float32),     # max accumulator
                    pltpu.VMEM((_SUBLANE, _LANE), jnp.float32),     # linear-sum acc
                    pltpu.VMEM((_SUBLANE, _LANE), jnp.float32),     # quadratic-sum acc
                    pltpu.SMEM((1,), jnp.float32),                  # delta
                ],
            ),
            compiler_params=pltpu.CompilerParams(
                dimension_semantics=("arbitrary", "arbitrary"),
                vmem_limit_bytes=_VMEM_LIMIT_BYTES,
            ),
            cost_estimate=pl.CostEstimate(flops=12 * rows * _LANE, transcendentals=0,
                                          bytes_accessed=hbm_bytes),
        )(jnp.reshape(tail_max, (1, 1)).astype(jnp.float32), real2d, fake2d)

        delta = out[0, 0]
        lin = out[0, 1]
        quad = out[0, 2]
    else:
        # ---------------- two-pass path (large tensors) ----------------
        tm = min(_TWO_PASS_BLOCK_ROWS, _round_up(rows, _SUBLANE))
        nb = _cdiv(rows, tm)
        nbh = _cdiv(nb, 2)                      # blocks per core half
        needs_mask = 2 * nbh * tm != rows
        if 2 * nbh > nb:
            # core 1's last logical block overruns -> clamp the HBM block index;
            # the in-kernel row mask zeroes that duplicate block's contribution.
            in_map = lambda c, i: (jnp.minimum(c * nbh + i, nb - 1), 0)
        else:
            in_map = lambda c, i: (c * nbh + i, 0)
        blk = pl.BlockSpec((tm, _LANE), in_map)
        cparams = pltpu.CompilerParams(
            dimension_semantics=("parallel", "arbitrary"),   # v7x: one half per TC
            vmem_limit_bytes=_VMEM_LIMIT_BYTES,
        )

        # ---- pass 1: per-core max of diff ----
        maxes = pl.pallas_call(
            _make_max_kernel(tm, rows, nbh, needs_mask),
            out_shape=jax.ShapeDtypeStruct((2, 1), jnp.float32),
            grid_spec=pltpu.PrefetchScalarGridSpec(
                num_scalar_prefetch=0,
                grid=(2, nbh),
                in_specs=[blk, blk],
                out_specs=pl.BlockSpec((1, 1), lambda c, i: (c, 0),
                                       memory_space=pltpu.SMEM),
                scratch_shapes=[pltpu.VMEM((_SUBLANE, _LANE), jnp.float32)],
            ),
            compiler_params=cparams,
            cost_estimate=pl.CostEstimate(flops=5 * rows * _LANE, transcendentals=0,
                                          bytes_accessed=hbm_bytes),
        )(real2d, fake2d)

        delta = jnp.float32(threshold) * jnp.maximum(jnp.max(maxes), tail_max)

        # ---- pass 2: per-core BerHu partial sums given delta ----
        sums = pl.pallas_call(
            _make_sum_kernel(tm, rows, nbh, needs_mask),
            out_shape=jax.ShapeDtypeStruct((2, 2), jnp.float32),
            grid_spec=pltpu.PrefetchScalarGridSpec(
                num_scalar_prefetch=0,
                grid=(2, nbh),
                in_specs=[
                    pl.BlockSpec((1, 1), lambda c, i: (0, 0), memory_space=pltpu.SMEM),
                    blk, blk,
                ],
                out_specs=pl.BlockSpec((1, 2), lambda c, i: (c, 0),
                                       memory_space=pltpu.SMEM),
                scratch_shapes=[pltpu.VMEM((_SUBLANE, _LANE), jnp.float32),
                                pltpu.VMEM((_SUBLANE, _LANE), jnp.float32)],
            ),
            compiler_params=cparams,
            cost_estimate=pl.CostEstimate(flops=9 * rows * _LANE, transcendentals=0,
                                          bytes_accessed=hbm_bytes),
        )(jnp.reshape(delta, (1, 1)), real2d, fake2d)

        lin = jnp.sum(sums[:, 0])
        quad = jnp.sum(sums[:, 1])

    if tail:
        p1, p2 = _berhu_parts(t_diff, delta)
        lin = lin + jnp.sum(p1)
        quad = quad + jnp.sum(p2)

    # delta == 0 yields NaN exactly like the torch module (0/0).
    loss = lin + quad / (2.0 * delta)
    return loss.astype(jnp.float32)


# ---------------------------------------------------------------------------
# Pure-JAX reference (mirrors the torch ops 1:1) + self-test
# ---------------------------------------------------------------------------
def _ref_berhu(real, fake, threshold=0.2):
    mask = (real > 0).astype(jnp.float32)
    if fake.shape != real.shape:
        _, _, H, W = real.shape
        fake = _resize_bilinear_align_corners(fake, H, W).astype(fake.dtype)
    realf = real.astype(jnp.float32)
    fakef = fake.astype(jnp.float32) * mask
    diff = jnp.abs(realf - fakef)
    delta = threshold * jnp.max(diff)
    # part1 = -F.threshold(-diff, -delta, 0)
    part1 = -jnp.where(-diff > -delta, -diff, 0.0)
    # part2 = (F.threshold(diff^2 - delta^2, 0, -delta^2) + delta^2) / (2*delta)
    part2 = jnp.where(diff ** 2 - delta ** 2 > 0.0, diff ** 2 - delta ** 2,
                      -delta ** 2) + delta ** 2
    part2 = part2 / (2.0 * delta)
    return jnp.sum(part1 + part2)


if __name__ == "__main__":
    key = jax.random.PRNGKey(0)
    k1, k2, k3, k4, k5 = jax.random.split(key, 5)

    # Case 1: matching shapes -> fused single-pass kernel.
    real = jax.random.normal(k1, (2, 4, 16, 16), dtype=jnp.float32)
    fake = jax.random.normal(k2, (2, 4, 16, 16), dtype=jnp.float32)
    out1 = jax.block_until_ready(berhu_loss(real, fake))
    ref1 = jax.block_until_ready(_ref_berhu(real, fake))
    assert jnp.allclose(out1, ref1, rtol=1e-5, atol=1e-4), (out1, ref1)

    # Case 2: mismatched shapes -> matmul-based bilinear(align_corners=True) resize.
    fake_small = jax.random.normal(k3, (2, 4, 8, 8), dtype=jnp.float32)
    out2 = jax.block_until_ready(berhu_loss(real, fake_small))
    ref2 = jax.block_until_ready(_ref_berhu(real, fake_small))
    assert jnp.allclose(out2, ref2, rtol=1e-5, atol=1e-4), (out2, ref2)

    # Case 3: exercise the large-tensor two-pass kernels (megacore-style grid).
    out3 = jax.block_until_ready(berhu_loss(real, fake, force_two_pass=True))
    assert jnp.allclose(out3, ref1, rtol=1e-5, atol=1e-4), (out3, ref1)

    # Case 4: element count not a multiple of 128 -> in-wrapper tail, no jnp.pad.
    real_r = jax.random.normal(k4, (1, 1, 40, 30), dtype=jnp.float32)
    fake_r = jax.random.normal(k5, (1, 1, 40, 30), dtype=jnp.float32)
    out4 = jax.block_until_ready(berhu_loss(real_r, fake_r))
    ref4 = jax.block_until_ready(_ref_berhu(real_r, fake_r))
    assert jnp.allclose(out4, ref4, rtol=1e-5, atol=1e-4), (out4, ref4)

    print("KERNEL_OK")
</pallas_src>

<mosaic_0001>
module attributes {stable_mosaic.version = 11 : i64} {
  func.func @kernel(%arg0: i32, %arg1: i32, %arg2: memref<1x1xf32, #tpu.memory_space<smem>>, %arg3: memref<16x128xf32, #tpu.memory_space<vmem>>, %arg4: memref<16x128xf32, #tpu.memory_space<vmem>>, %arg5: memref<1x3xf32, #tpu.memory_space<smem>>, %arg6: memref<16x128xf32, #tpu.memory_space<vmem>>, %arg7: memref<8x128xf32, #tpu.memory_space<vmem>>, %arg8: memref<8x128xf32, #tpu.memory_space<vmem>>, %arg9: memref<8x128xf32, #tpu.memory_space<vmem>>, %arg10: memref<1xf32, #tpu.memory_space<smem>>) attributes {dimension_semantics = [#tpu.dimension_semantics<arbitrary>, #tpu.dimension_semantics<arbitrary>], iteration_bounds = array<i64: 2, 1>, scalar_prefetch = 0 : i64, scratch_operands = 5 : i64, tpu.core_type = #tpu.core_type<tc>, window_params = [{transform_indices = @transform_0, window_bounds = array<i64: 1, 1>}, {transform_indices = @transform_1, window_bounds = array<i64: 16, 128>}, {transform_indices = @transform_2, window_bounds = array<i64: 16, 128>}, {transform_indices = @transform_3, window_bounds = array<i64: 1, 3>}]} {
    %c0_i32 = arith.constant 0 : i32
    %0 = arith.cmpi eq, %arg0, %c0_i32 : i32
    %c0_i32_0 = arith.constant 0 : i32
    %1 = arith.cmpi eq, %arg1, %c0_i32_0 : i32
    %2 = arith.andi %0, %1 : i1
    %3 = arith.extui %2 : i1 to i32
    %c0_i32_1 = arith.constant 0 : i32
    %4 = arith.cmpi ne, %3, %c0_i32_1 : i32
    scf.if %4 {
      %cst = arith.constant 0.000000e+00 : f32
      %11 = vector.broadcast %cst : f32 to vector<8x128xf32>
      %c0 = arith.constant 0 : index
      %c0_5 = arith.constant 0 : index
      %12 = vector.load %arg7[%c0, %c0_5] : memref<8x128xf32, #tpu.memory_space<vmem>>, vector<8x128xf32>
      tpu.vector_store %arg7[%c0, %c0_5], %11 {strides = array<i32>} : memref<8x128xf32, #tpu.memory_space<vmem>>, vector<8x128xf32>,
      %cst_6 = arith.constant 0.000000e+00 : f32
      %13 = vector.broadcast %cst_6 : f32 to vector<8x128xf32>
      %c0_7 = arith.constant 0 : index
      %c0_8 = arith.constant 0 : index
      %14 = vector.load %arg8[%c0_7, %c0_8] : memref<8x128xf32, #tpu.memory_space<vmem>>, vector<8x128xf32>
      tpu.vector_store %arg8[%c0_7, %c0_8], %13 {strides = array<i32>} : memref<8x128xf32, #tpu.memory_space<vmem>>, vector<8x128xf32>,
      %cst_9 = arith.constant 0.000000e+00 : f32
      %15 = vector.broadcast %cst_9 : f32 to vector<8x128xf32>
      %c0_10 = arith.constant 0 : index
      %c0_11 = arith.constant 0 : index
      %16 = vector.load %arg9[%c0_10, %c0_11] : memref<8x128xf32, #tpu.memory_space<vmem>>, vector<8x128xf32>
      tpu.vector_store %arg9[%c0_10, %c0_11], %15 {strides = array<i32>} : memref<8x128xf32, #tpu.memory_space<vmem>>, vector<8x128xf32>,
    } else {
    }
    %c0_i32_2 = arith.constant 0 : i32
    %5 = arith.cmpi eq, %arg0, %c0_i32_2 : i32
    %6 = arith.extui %5 : i1 to i32
    %c0_i32_3 = arith.constant 0 : i32
    %7 = arith.cmpi ne, %6, %c0_i32_3 : i32
    scf.if %7 {
      %c16_i32 = arith.constant 16 : i32
      %11 = arith.muli %arg1, %c16_i32 : i32
      %c0 = arith.constant 0 : index
      %c0_5 = arith.constant 0 : index
      %12 = vector.load %arg3[%c0, %c0_5] : memref<16x128xf32, #tpu.memory_space<vmem>>, vector<16x128xf32>
      %c0_6 = arith.constant 0 : index
      %c0_7 = arith.constant 0 : index
      %13 = vector.load %arg4[%c0_6, %c0_7] : memref<16x128xf32, #tpu.memory_space<vmem>>, vector<16x128xf32>
      %cst = arith.constant 0.000000e+00 : f32
      %14 = vector.broadcast %cst : f32 to vector<16x128xf32>
      %15 = arith.cmpf ogt, %12, %14 : vector<16x128xf32>
      %cst_8 = arith.constant 0.000000e+00 : f32
      %16 = vector.broadcast %cst_8 : f32 to vector<16x128xf32>
      %17 = arith.select %15, %13, %16 : vector<16x128xi1>, vector<16x128xf32>
      %18 = arith.subf %12, %17 : vector<16x128xf32>
      %19 = math.absf %18 : vector<16x128xf32>
      %c0_i32_9 = arith.constant 0 : i32
      %20 = arith.addi %11, %c0_i32_9 : i32
      %21 = tpu.assume_multiple %20, 8 : i32
      %22 = arith.index_cast %21 : i32 to index
      %c0_10 = arith.constant 0 : index
      %23 = vector.load %arg6[%22, %c0_10] : memref<16x128xf32, #tpu.memory_space<vmem>>, vector<16x128xf32>
      tpu.vector_store %arg6[%22, %c0_10], %19 {strides = array<i32>} : memref<16x128xf32, #tpu.memory_space<vmem>>, vector<16x128xf32>,
      %24 = vector.shape_cast %19 : vector<16x128xf32> to vector<2x8x128xf32>
      %cst_11 = arith.constant dense<0xFF800000> : vector<8x128xf32>
      %25 = vector.multi_reduction <maximumf>, %24, %cst_11 [0] : vector<2x8x128xf32> to vector<8x128xf32>
      %c0_12 = arith.constant 0 : index
      %c0_13 = arith.constant 0 : index
      %26 = vector.load %arg7[%c0_12, %c0_13] : memref<8x128xf32, #tpu.memory_space<vmem>>, vector<8x128xf32>
      %27 = arith.maximumf %26, %25 : vector<8x128xf32>
      %c0_14 = arith.constant 0 : index
      %c0_15 = arith.constant 0 : index
      %28 = vector.load %arg7[%c0_14, %c0_15] : memref<8x128xf32, #tpu.memory_space<vmem>>, vector<8x128xf32>
      tpu.vector_store %arg7[%c0_14, %c0_15], %27 {strides = array<i32>} : memref<8x128xf32, #tpu.memory_space<vmem>>, vector<8x128xf32>,
      %c0_i32_16 = arith.constant 0 : i32
      %29 = arith.cmpi eq, %arg1, %c0_i32_16 : i32
      %30 = arith.extui %29 : i1 to i32
      %c0_i32_17 = arith.constant 0 : i32
      %31 = arith.cmpi ne, %30, %c0_i32_17 : i32
      scf.if %31 {
        %c0_18 = arith.constant 0 : index
        %c0_19 = arith.constant 0 : index
        %32 = vector.load %arg7[%c0_18, %c0_19] : memref<8x128xf32, #tpu.memory_space<vmem>>, vector<8x128xf32>
        %33 = vector.shape_cast %32 : vector<8x128xf32> to vector<1x8x128xf32>
        %cst_20 = arith.constant dense<0xFF800000> : vector<1xf32>
        %34 = vector.multi_reduction <maximumf>, %33, %cst_20 [1, 2] : vector<1x8x128xf32> to vector<1xf32>
        %35 = vector.shape_cast %34 : vector<1xf32> to vector<1x1x1xf32>
        %36 = vector.extract %35[0, 0, 0] : f32 from vector<1x1x1xf32>
        %c0_21 = arith.constant 0 : index
        %c0_22 = arith.constant 0 : index
        %37 = memref.load %arg2[%c0_21, %c0_22] : memref<1x1xf32, #tpu.memory_space<smem>>
        %38 = arith.maximumf %36, %37 : f32
        %cst_23 = arith.constant 2.000000e-01 : f32
        %39 = arith.mulf %cst_23, %38 : f32
        %c0_24 = arith.constant 0 : index
        %40 = memref.load %arg10[%c0_24] : memref<1xf32, #tpu.memory_space<smem>>
        memref.store %39, %arg10[%c0_24] : memref<1xf32, #tpu.memory_space<smem>>
      } else {
      }
    } else {
    }
    %c1_i32 = arith.constant 1 : i32
    %8 = arith.cmpi eq, %arg0, %c1_i32 : i32
    %9 = arith.extui %8 : i1 to i32
    %c0_i32_4 = arith.constant 0 : i32
    %10 = arith.cmpi ne, %9, %c0_i32_4 : i32
    scf.if %10 {
      %c0 = arith.constant 0 : index
      %11 = memref.load %arg10[%c0] : memref<1xf32, #tpu.memory_space<smem>>
      %c16_i32 = arith.constant 16 : i32
      %12 = arith.muli %arg1, %c16_i32 : i32
      %c0_i32_5 = arith.constant 0 : i32
      %13 = arith.addi %12, %c0_i32_5 : i32
      %14 = tpu.assume_multiple %13, 8 : i32
      %15 = arith.index_cast %14 : i32 to index
      %c0_6 = arith.constant 0 : index
      %16 = vector.load %arg6[%15, %c0_6] : memref<16x128xf32, #tpu.memory_space<vmem>>, vector<16x128xf32>
      %17 = vector.broadcast %11 : f32 to vector<16x128xf32>
      %18 = arith.cmpf olt, %16, %17 : vector<16x128xf32>
      %cst = arith.constant 0.000000e+00 : f32
      %19 = vector.broadcast %cst : f32 to vector<16x128xf32>
      %20 = arith.select %18, %16, %19 : vector<16x128xi1>, vector<16x128xf32>
      %21 = arith.mulf %16, %16 : vector<16x128xf32>
      %22 = arith.mulf %11, %11 : f32
      %23 = vector.broadcast %22 : f32 to vector<16x128xf32>
      %24 = arith.cmpf ogt, %21, %23 : vector<16x128xf32>
      %cst_7 = arith.constant 0.000000e+00 : f32
      %25 = vector.broadcast %cst_7 : f32 to vector<16x128xf32>
      %26 = arith.select %24, %21, %25 : vector<16x128xi1>, vector<16x128xf32>
      %c0_8 = arith.constant 0 : index
      %c0_9 = arith.constant 0 : index
      %27 = vector.load %arg8[%c0_8, %c0_9] : memref<8x128xf32, #tpu.memory_space<vmem>>, vector<8x128xf32>
      %28 = vector.shape_cast %20 : vector<16x128xf32> to vector<2x8x128xf32>
      %cst_10 = arith.constant dense<0.000000e+00> : vector<8x128xf32>
      %29 = vector.multi_reduction <add>, %28, %cst_10 [0] : vector<2x8x128xf32> to vector<8x128xf32>
      %30 = arith.addf %27, %29 : vector<8x128xf32>
      %c0_11 = arith.constant 0 : index
      %c0_12 = arith.constant 0 : index
      %31 = vector.load %arg8[%c0_11, %c0_12] : memref<8x128xf32, #tpu.memory_space<vmem>>, vector<8x128xf32>
      tpu.vector_store %arg8[%c0_11, %c0_12], %30 {strides = array<i32>} : memref<8x128xf32, #tpu.memory_space<vmem>>, vector<8x128xf32>,
      %c0_13 = arith.constant 0 : index
      %c0_14 = arith.constant 0 : index
      %32 = vector.load %arg9[%c0_13, %c0_14] : memref<8x128xf32, #tpu.memory_space<vmem>>, vector<8x128xf32>
      %33 = vector.shape_cast %26 : vector<16x128xf32> to vector<2x8x128xf32>
      %cst_15 = arith.constant dense<0.000000e+00> : vector<8x128xf32>
      %34 = vector.multi_reduction <add>, %33, %cst_15 [0] : vector<2x8x128xf32> to vector<8x128xf32>
      %35 = arith.addf %32, %34 : vector<8x128xf32>
      %c0_16 = arith.constant 0 : index
      %c0_17 = arith.constant 0 : index
      %36 = vector.load %arg9[%c0_16, %c0_17] : memref<8x128xf32, #tpu.memory_space<vmem>>, vector<8x128xf32>
      tpu.vector_store %arg9[%c0_16, %c0_17], %35 {strides = array<i32>} : memref<8x128xf32, #tpu.memory_space<vmem>>, vector<8x128xf32>,
      %c0_i32_18 = arith.constant 0 : i32
      %37 = arith.cmpi eq, %arg1, %c0_i32_18 : i32
      %38 = arith.extui %37 : i1 to i32
      %c0_i32_19 = arith.constant 0 : i32
      %39 = arith.cmpi ne, %38, %c0_i32_19 : i32
      scf.if %39 {
        %c0_20 = arith.constant 0 : index
        %40 = memref.load %arg10[%c0_20] : memref<1xf32, #tpu.memory_space<smem>>
        %c0_21 = arith.constant 0 : index
        %c0_22 = arith.constant 0 : index
        %41 = memref.load %arg5[%c0_21, %c0_22] : memref<1x3xf32, #tpu.memory_space<smem>>
        memref.store %40, %arg5[%c0_21, %c0_22] : memref<1x3xf32, #tpu.memory_space<smem>>
        %c0_23 = arith.constant 0 : index
        %c0_24 = arith.constant 0 : index
        %42 = vector.load %arg8[%c0_23, %c0_24] : memref<8x128xf32, #tpu.memory_space<vmem>>, vector<8x128xf32>
        %43 = vector.shape_cast %42 : vector<8x128xf32> to vector<1x8x128xf32>
        %cst_25 = arith.constant dense<0.000000e+00> : vector<1xf32>
        %44 = vector.multi_reduction <add>, %43, %cst_25 [1, 2] : vector<1x8x128xf32> to vector<1xf32>
        %45 = vector.shape_cast %44 : vector<1xf32> to vector<1x1x1xf32>
        %46 = vector.extract %45[0, 0, 0] : f32 from vector<1x1x1xf32>
        %c0_26 = arith.constant 0 : index
        %c1 = arith.constant 1 : index
        %47 = memref.load %arg5[%c0_26, %c1] : memref<1x3xf32, #tpu.memory_space<smem>>
        memref.store %46, %arg5[%c0_26, %c1] : memref<1x3xf32, #tpu.memory_space<smem>>
        %c0_27 = arith.constant 0 : index
        %c0_28 = arith.constant 0 : index
        %48 = vector.load %arg9[%c0_27, %c0_28] : memref<8x128xf32, #tpu.memory_space<vmem>>, vector<8x128xf32>
        %49 = vector.shape_cast %48 : vector<8x128xf32> to vector<1x8x128xf32>
        %cst_29 = arith.constant dense<0.000000e+00> : vector<1xf32>
        %50 = vector.multi_reduction <add>, %49, %cst_29 [1, 2] : vector<1x8x128xf32> to vector<1xf32>
        %51 = vector.shape_cast %50 : vector<1xf32> to vector<1x1x1xf32>
        %52 = vector.extract %51[0, 0, 0] : f32 from vector<1x1x1xf32>
        %c0_30 = arith.constant 0 : index
        %c2 = arith.constant 2 : index
        %53 = memref.load %arg5[%c0_30, %c2] : memref<1x3xf32, #tpu.memory_space<smem>>
        memref.store %52, %arg5[%c0_30, %c2] : memref<1x3xf32, #tpu.memory_space<smem>>
      } else {
      }
    } else {
    }
    return
  }
  func.func @transform_0(%arg0: i32, %arg1: i32) -> (i32, i32) {
    %c0_i32 = arith.constant 0 : i32
    %c0_i32_0 = arith.constant 0 : i32
    %c0_i32_1 = arith.constant 0 : i32
    return %c0_i32, %c0_i32_0 : i32, i32
  }
  func.func @transform_1(%arg0: i32, %arg1: i32) -> (i32, i32) {
    %c1_i32 = arith.constant 1 : i32
    %0 = arith.subi %c1_i32, %arg0 : i32
    %1 = arith.muli %arg1, %0 : i32
    %c0_i32 = arith.constant 0 : i32
    %2 = arith.muli %c0_i32, %arg0 : i32
    %3 = arith.addi %1, %2 : i32
    %c0_i32_0 = arith.constant 0 : i32
    %c0_i32_1 = arith.constant 0 : i32
    return %3, %c0_i32_0 : i32, i32
  }
  func.func @transform_2(%arg0: i32, %arg1: i32) -> (i32, i32) {
    %c1_i32 = arith.constant 1 : i32
    %0 = arith.subi %c1_i32, %arg0 : i32
    %1 = arith.muli %arg1, %0 : i32
    %c0_i32 = arith.constant 0 : i32
    %2 = arith.muli %c0_i32, %arg0 : i32
    %3 = arith.addi %1, %2 : i32
    %c0_i32_0 = arith.constant 0 : i32
    %c0_i32_1 = arith.constant 0 : i32
    return %3, %c0_i32_0 : i32, i32
  }
  func.func @transform_3(%arg0: i32, %arg1: i32) -> (i32, i32) {
    %c0_i32 = arith.constant 0 : i32
    %c0_i32_0 = arith.constant 0 : i32
    %c0_i32_1 = arith.constant 0 : i32
    return %c0_i32, %c0_i32_0 : i32, i32
  }
}

</mosaic_0001>

<llo_original>
// kernel: berhu_loss.1
$region0: #{berhu_loss.1}
  #allocation0 [shape = 'u32[]', space=smem, size = 0x4, offset = 0x4, fixed_abs, tag = 'smem constant byte address 0x4 - core index']
  #allocation1 [shape = 'u32[144,128]{1,0:T(1,128)}', space=vmem, size = 0x12000, scoped, tag = 'internal scratch']
  #allocation2 [shape = 'f32[16,128]{1,0:T(8,128)}', space=vmem, size = 0x2000, scoped, tag = 'scratch operand']
  #allocation3 [shape = 'f32[8,128]{1,0:T(8,128)}', space=vmem, size = 0x1000, scoped, tag = 'scratch operand']
  #allocation4 [shape = 'f32[8,128]{1,0:T(8,128)}', space=vmem, size = 0x1000, scoped, tag = 'scratch operand']
  #allocation5 [shape = 'f32[8,128]{1,0:T(8,128)}', space=vmem, size = 0x1000, scoped, tag = 'scratch operand']
  #allocation6 [shape = 'f32[1]{0:T(128)}', space=smem, size = 0x200, scoped, tag = 'scratch operand']
  #allocation7 [shape = 'f32[1,1]{1,0:T(1,128)S(6)}', space=smem, size = 0x200, scoped, tag = 'scoped memory for berhu_loss.1']
  %s0 = inlined_call_operand.<no memory space> [shape: f32[1,1], index: 0, kind: input, shape index: {}]
  %s1 = inlined_call_operand.vmem [shape: f32[16,128], index: 1, kind: input, shape index: {}]
  %s2 = inlined_call_operand.vmem [shape: f32[16,128], index: 2, kind: input, shape index: {}]
  %s3 = inlined_call_operand.vmem [shape: f32[1,3], index: 3, kind: output, shape index: {}]
  %s4 = sld [smem:[#allocation0]]
  $region65: #{berhu_loss.1} parent=0
    _
  %s6 = ssub.s32 1, %s4
  %s7 = scalar_select 0, %s6, %s4
  %8 = sst [smem:[#allocation7]] %s0
  $region1: #{berhu_loss.1} parent=0
    #allocation8 [shape = 'u8[512]{0}', space=smem, size = 0x200, scoped, tag = 'output window, operand 0, single buffered']
    #allocation9 [shape = 's32[2]{0}', space=sflag, size = 0x8, scoped, tag = 'scoped memory for berhu_loss.1']
    %9 = vsyncpa [#allocation9], 0
    loop: start=0, step=1, limit=4
    $region2: #{berhu_loss.1} parent=1 // loop_pre_header
      _
    $region3: #{berhu_loss.1} parent=1 // loop_header
      %s11 = sphi 0, %s15
      %p12 = scmp.ge.s32.totalorder %s11, 4
      %s18 = sphi 0, %s30
      %s19 = sphi 0, %s26
      %s20 = sphi 0, %s18
      %s21 = sphi 0, %s19
      %s22 = sphi 0, %s20
      %s23 = sphi 0, %s21
      %s31 = sphi 0, %s31
      %s33 = sphi 0, %s31
      %s34 = sphi 0, %s33
      %s48 = sphi 0, %s34
      %s58 = sphi 0, %s60
      %s61 = sphi 0, %s58
      %s62 = sphi 0, %s61
      %s78 = sphi 0, %s62
      %s88 = sphi 0, %s90
      %s91 = sphi 0, %s88
      %s92 = sphi 0, %s91
      %s108 = sphi 0, %s92
      %s112 = sphi 0, %s112
      %s114 = sphi 0, %s112
      %s115 = sphi 0, %s114
      %s129 = sphi 0, %s115
    $region4: #{berhu_loss.1} parent=1 // loop_header_branch
      %14 = sbr.rel (%p12) target = $region8
    $region5: #{berhu_loss.1} parent=1 // loop_body
      %s16 = ssub.s32 %s11, 1
      %s17 = ssub.s32 %s11, 2
      %s24 = sadd.s32 1, %s19
      %p25 = scmp.ge.s32.totalorder %s24, 1
      %s26 = scalar_select %p25, 0, %s24
      %s27 = sadd.s32 1, %s18
      %s28 = scalar_select %p25, %s27, %s18
      %p29 = scmp.ge.s32.totalorder %s28, 2
      %s30 = scalar_select %p29, 0, %s28
      %s32 = sadd.s32 %s31, 1
      %p35 = scmp.eq.s32.totalorder %s11, 1
      %p36 = scmp.ne.s32.totalorder %s31, %s33
      %p37 = scmp.eq.s32.totalorder %s11, 0
      %p38 = por %p36, %p37
      %p39 = scmp.ne.s32.totalorder %s31, %s33
      %p40 = scmp.eq.s32.totalorder %s16, 1
      %p41 = por %p39, %p40
      %p42 = scmp.ne.s32.totalorder %s33, %s34
      %p43 = scmp.eq.s32.totalorder %s16, 0
      %p44 = por %p42, %p43
      %p45 = scmp.ne.s32.totalorder %s33, %s34
      %p46 = scmp.eq.s32.totalorder %s17, 1
      %p47 = por %p45, %p46
      %p49 = scmp.ne.s32.totalorder %s34, %s48
      %p50 = scmp.eq.s32.totalorder %s17, 0
      %p51 = por %p49, %p50
      %s52 = ssub.s32 1, %s18
      %s53 = smul.u32 %s19, %s52
      %s54 = ssub.s32 1, %s30
      %s55 = smul.u32 %s26, %s54
      %s56 = ssub.s32 %s53, %s55
      %p57 = scmp.eq.s32.totalorder %s56, 0
      %s59 = sadd.s32 %s58, 1
      %s60 = scalar_select %p57, %s58, %s59
      %p63 = pneg %p57
      %p64 = scmp.eq.s32.totalorder %s11, 1
      %p65 = por %p63, %p64
      %p66 = scmp.ne.s32.totalorder %s58, %s61
      %p67 = scmp.eq.s32.totalorder %s11, 0
      %p68 = por %p66, %p67
      %p69 = scmp.ne.s32.totalorder %s58, %s61
      %p70 = scmp.eq.s32.totalorder %s16, 1
      %p71 = por %p69, %p70
      %p72 = scmp.ne.s32.totalorder %s61, %s62
      %p73 = scmp.eq.s32.totalorder %s16, 0
      %p74 = por %p72, %p73
      %p75 = scmp.ne.s32.totalorder %s61, %s62
      %p76 = scmp.eq.s32.totalorder %s17, 1
      %p77 = por %p75, %p76
      %p79 = scmp.ne.s32.totalorder %s62, %s78
      %p80 = scmp.eq.s32.totalorder %s17, 0
      %p81 = por %p79, %p80
      %s82 = ssub.s32 1, %s18
      %s83 = smul.u32 %s19, %s82
      %s84 = ssub.s32 1, %s30
      %s85 = smul.u32 %s26, %s84
      %s86 = ssub.s32 %s83, %s85
      %p87 = scmp.eq.s32.totalorder %s86, 0
      %s89 = sadd.s32 %s88, 1
      %s90 = scalar_select %p87, %s88, %s89
      %p93 = pneg %p87
      %p94 = scmp.eq.s32.totalorder %s11, 1
      %p95 = por %p93, %p94
      %p96 = scmp.ne.s32.totalorder %s88, %s91
      %p97 = scmp.eq.s32.totalorder %s11, 0
      %p98 = por %p96, %p97
      %p99 = scmp.ne.s32.totalorder %s88, %s91
      %p100 = scmp.eq.s32.totalorder %s16, 1
      %p101 = por %p99, %p100
      %p102 = scmp.ne.s32.totalorder %s91, %s92
      %p103 = scmp.eq.s32.totalorder %s16, 0
      %p104 = por %p102, %p103
      %p105 = scmp.ne.s32.totalorder %s91, %s92
      %p106 = scmp.eq.s32.totalorder %s17, 1
      %p107 = por %p105, %p106
      %p109 = scmp.ne.s32.totalorder %s92, %s108
      %p110 = scmp.eq.s32.totalorder %s17, 0
      %p111 = por %p109, %p110
      %s113 = sadd.s32 %s112, 1
      %p116 = scmp.eq.s32.totalorder %s11, 1
      %p117 = scmp.ne.s32.totalorder %s112, %s114
      %p118 = scmp.eq.s32.totalorder %s11, 0
      %p119 = por %p117, %p118
      %p120 = scmp.ne.s32.totalorder %s112, %s114
      %p121 = scmp.eq.s32.totalorder %s16, 1
      %p122 = por %p120, %p121
      %p123 = scmp.ne.s32.totalorder %s114, %s115
      %p124 = scmp.eq.s32.totalorder %s16, 0
      %p125 = por %p123, %p124
      %p126 = scmp.ne.s32.totalorder %s114, %s115
      %p127 = scmp.eq.s32.totalorder %s17, 1
      %p128 = por %p126, %p127
      %p130 = scmp.ne.s32.totalorder %s115, %s129
      %p131 = scmp.eq.s32.totalorder %s17, 0
      %p132 = por %p130, %p131
      %p133 = scmp.le.s32.totalorder 1, %s11
      %p134 = scmp.lt.s32.totalorder %s11, 3
      %p135 = pnand %p133, %p134
      %p136 = pneg %p135
      // Predicated region
      $region9: #{berhu_loss.1} parent=5 // pred_check
        _
      $region10: #{berhu_loss.1} parent=5 // pred_check_branch
        %138 = sbr.rel (%p135) target = $region12
      $region11: #{berhu_loss.1} parent=5 // pred_region
        %s139 = ssub.s32 %s11, 1
        // Predicated region
        $region13: #{berhu_loss.1} parent=11 // pred_check
          %p140 = pneg %p44
        $region14: #{berhu_loss.1} parent=11 // pred_check_branch
          %142 = sbr.rel (%p140) target = $region16
        $region15: #{berhu_loss.1} parent=11 // pred_region
          _
        $region16: #{berhu_loss.1} parent=11 // pred_fallthru
          _
      $region12: #{berhu_loss.1} parent=5 // pred_fallthru
        _
      %p143 = scmp.lt.s32.totalorder %s11, 2
      // Predicated region
      $region17: #{berhu_loss.1} parent=5 // pred_check
        %p144 = pneg %p143
      $region18: #{berhu_loss.1} parent=5 // pred_check_branch
        %146 = sbr.rel (%p144) target = $region20
      $region19: #{berhu_loss.1} parent=5 // pred_region
        // Predicated region
        $region21: #{berhu_loss.1} parent=19 // pred_check
          %p147 = pneg %p68
        $region22: #{berhu_loss.1} parent=19 // pred_check_branch
          %149 = sbr.rel (%p147) target = $region24
        $region23: #{berhu_loss.1} parent=19 // pred_region
          %s150 = ssub.s32 1, %s18
          %s151 = smul.u32 %s19, %s150
          %s152 = smul.u32 2, %s151
          %p153 = scmp.lt.s32.totalorder %s152, 1
          %s154 = scalar_select %p153, %s152, 1
          %s155 = smul.addr %s154, 8
          %s156 = scalar_lea.vmem %s1, %s155
          %s157 = ssub.s32 1, %s18
          %s158 = smul.u32 %s19, %s157
          %s159 = smul.u32 2, %s158
        $region24: #{berhu_loss.1} parent=19 // pred_fallthru
          _
        // Predicated region
        $region25: #{berhu_loss.1} parent=19 // pred_check
          %p160 = pneg %p98
        $region26: #{berhu_loss.1} parent=19 // pred_check_branch
          %162 = sbr.rel (%p160) target = $region28
        $region27: #{berhu_loss.1} parent=19 // pred_region
          %s163 = ssub.s32 1, %s18
          %s164 = smul.u32 %s19, %s163
          %s165 = smul.u32 2, %s164
          %p166 = scmp.lt.s32.totalorder %s165, 1
          %s167 = scalar_select %p166, %s165, 1
          %s168 = smul.addr %s167, 8
          %s169 = scalar_lea.vmem %s2, %s168
          %s170 = ssub.s32 1, %s18
          %s171 = smul.u32 %s19, %s170
          %s172 = smul.u32 2, %s171
        $region28: #{berhu_loss.1} parent=19 // pred_fallthru
          _
      $region20: #{berhu_loss.1} parent=5 // pred_fallthru
        _
      %p173 = scmp.le.s32.totalorder 1, %s11
      %p174 = scmp.lt.s32.totalorder %s11, 3
      %p175 = pnand %p173, %p174
      %p176 = pneg %p175
      // Predicated region
      $region29: #{berhu_loss.1} parent=5 // pred_check
        _
      $region30: #{berhu_loss.1} parent=5 // pred_check_branch
        %178 = sbr.rel (%p175) target = $region32
      $region31: #{berhu_loss.1} parent=5 // pred_region
        %s179 = ssub.s32 %s11, 1
        %p180 = pneg %p44
        %p181 = pneg %p41
        %s182 = ssub.s32 1, %s20
        %s183 = smul.u32 %s21, %s182
        %s184 = smul.u32 2, %s183
        %p185 = scmp.lt.s32.totalorder %s184, 1
        %s186 = scalar_select %p185, %s184, 1
        %s187 = smul.addr %s186, 8
        %s188 = scalar_lea.vmem %s1, %s187
        %p189 = pneg %p74
        %p190 = pneg %p71
        %s191 = ssub.s32 1, %s20
        %s192 = smul.u32 %s21, %s191
        %s193 = smul.u32 2, %s192
        %p194 = scmp.lt.s32.totalorder %s193, 1
        %s195 = scalar_select %p194, %s193, 1
        %s196 = smul.addr %s195, 8
        %s197 = scalar_lea.vmem %s2, %s196
        %p198 = pneg %p104
        %p199 = pneg %p101
        %p200 = pneg %p125
        %p201 = pneg %p122
        %s202 = ssub.s32 1, %s20
        %s203 = smul.u32 %s21, %s202
        %s204 = smul.u32 2, %s203
        %p205 = scmp.lt.s32.totalorder %s204, 1
        %s206 = scalar_select %p205, %s204, 1
        %s207 = smul.addr %s206, 8
        %s208 = scalar_lea.vmem %s1, %s207
        %s209 = ssub.s32 1, %s20
        %s210 = smul.u32 %s21, %s209
        %s211 = smul.u32 2, %s210
        %s212 = ssub.s32 1, %s20
        %s213 = smul.u32 %s21, %s212
        %s214 = smul.u32 2, %s213
        %p215 = scmp.lt.s32.totalorder %s214, 1
        %s216 = scalar_select %p215, %s214, 1
        %s217 = smul.addr %s216, 8
        %s218 = scalar_lea.vmem %s2, %s217
        %s219 = ssub.s32 1, %s20
        %s220 = smul.u32 %s21, %s219
        %s221 = smul.u32 2, %s220
        %p222 = scmp.eq.s32.totalorder %s20, 0
        %p223 = scmp.eq.s32.totalorder %s21, 0
        %p224 = pnand %p222, %p223
        %p225 = pneg %p224
        // Predicated region
        $region33: #{berhu_loss.1} parent=31 // pred_check
          _
        $region34: #{berhu_loss.1} parent=31 // pred_check_branch
          %227 = sbr.rel (%p224) target = $region36
        $region35: #{berhu_loss.1} parent=31 // pred_region
          %228 = vst [vmem:[#allocation3] sm:$0xff] 0.0
          %229 = vst [vmem:[#allocation4] sm:$0xff] 0.0
          %230 = vst [vmem:[#allocation5] sm:$0xff] 0.0
        $region36: #{berhu_loss.1} parent=31 // pred_fallthru
          _
        // Predicated region
        $region37: #{berhu_loss.1} parent=31 // pred_check
          %p231 = pneg %p222
        $region38: #{berhu_loss.1} parent=31 // pred_check_branch
          %233 = sbr.rel (%p231) target = $region40
        $region39: #{berhu_loss.1} parent=31 // pred_region
          %s234 = smul.u32 %s21, 16
          %v235 = vld [vmem:[%s208] sm:$0xff]
          %v236 = vld [vmem:[%s208 + $0x8] sm:$0xff]
          %v237 = vld [vmem:[%s218] sm:$0xff]
          %v238 = vld [vmem:[%s218 + $0x8] sm:$0xff]
          %vm239 = vcmp.gt.f32.partialorder %v235, 0.0
          %vm240 = vcmp.gt.f32.partialorder %v236, 0.0
          %v241 = vsel %vm239, %v237, 0.0
          %v242 = vsel %vm240, %v238, 0.0
          %v243 = vsub.f32 %v235, %v241
          %v244 = vsub.f32 %v236, %v242
          %v245 = vand.u32 2147483647, %v243
          %v246 = vand.u32 2147483647, %v244
          %s247 = scalar_lea.vmem [#allocation2], %s234
          %248 = vst [vmem:[%s247] sm:$0xff] %v245
          %249 = vst [vmem:[%s247 + $0x8] sm:$0xff] %v246
          %v250 = vmax.f32 %v245, %v246
          %v251 = vld [vmem:[#allocation3] sm:$0xff]
          %v252 = vmax.f32 %v251, %v250
          %253 = vst [vmem:[#allocation3] sm:$0xff] %v252
          // Predicated region
          $region41: #{berhu_loss.1} parent=39 // pred_check
            %p254 = pneg %p223
          $region42: #{berhu_loss.1} parent=39 // pred_check_branch
            %256 = sbr.rel (%p254) target = $region44
          $region43: #{berhu_loss.1} parent=39 // pred_region
            %v257 = vld [vmem:[#allocation3] sm:$0xff]
            %258 = vmax.xlane.f32.xlu0 %v257
            %v259 = vpop.xlane.xlu0 %258
            %v260 = vrot.slane %v259, 4
            %v261 = vmax.f32 %v259, %v260
            %v262 = vrot.slane %v261, 2
            %v263 = vmax.f32 %v261, %v262
            %v264 = vrot.slane %v263, 1
            %v265 = vmax.f32 %v263, %v264
            %s266 = vtos %v265
            %s267 = sld [smem:[#allocation7]]
            %s268 = smax.f32 %s266, %s267
            %s269 = smul.f32 %s268, 0.2
            %s270 = scalar_lea.smem [#allocation6], 0
            %271 = sst [smem:[%s270]] %s269
          $region44: #{berhu_loss.1} parent=39 // pred_fallthru
            _
        $region40: #{berhu_loss.1} parent=31 // pred_fallthru
          _
        %p272 = scmp.eq.s32.totalorder %s20, 1
        // Predicated region
        $region45: #{berhu_loss.1} parent=31 // pred_check
          %p273 = pneg %p272
        $region46: #{berhu_loss.1} parent=31 // pred_check_branch
          %275 = sbr.rel (%p273) target = $region48
        $region47: #{berhu_loss.1} parent=31 // pred_region
          %s276 = sld [smem:[#allocation6]]
          %s277 = smul.u32 %s21, 16
          %s278 = scalar_lea.vmem [#allocation2], %s277
          %v279 = vld [vmem:[%s278] sm:$0xff]
          %v280 = vld [vmem:[%s278 + $0x8] sm:$0xff]
          %v281 = vstv %s276
          %vm282 = vcmp.lt.f32.partialorder %v279, %v281
          %vm283 = vcmp.lt.f32.partialorder %v280, %v281
          %v284 = vsel %vm282, %v279, 0.0
          %v285 = vsel %vm283, %v280, 0.0
          %v286 = vmul.f32 %v279, %v279
          %v287 = vmul.f32 %v280, %v280
          %s288 = smul.f32 %s276, %s276
          %v289 = vstv %s288
          %vm290 = vcmp.gt.f32.partialorder %v286, %v289
          %vm291 = vcmp.gt.f32.partialorder %v287, %v289
          %v292 = vsel %vm290, %v286, 0.0
          %v293 = vsel %vm291, %v287, 0.0
          %v294 = vld [vmem:[#allocation4] sm:$0xff]
          %v295 = vadd.f32 %v284, %v285
          %v296 = vadd.f32 %v294, %v295
          %297 = vst [vmem:[#allocation4] sm:$0xff] %v296
          %v298 = vld [vmem:[#allocation5] sm:$0xff]
          %v299 = vadd.f32 %v292, %v293
          %v300 = vadd.f32 %v298, %v299
          %301 = vst [vmem:[#allocation5] sm:$0xff] %v300
          // Predicated region
          $region49: #{berhu_loss.1} parent=47 // pred_check
            %p302 = pneg %p223
          $region50: #{berhu_loss.1} parent=47 // pred_check_branch
            %304 = sbr.rel (%p302) target = $region52
          $region51: #{berhu_loss.1} parent=47 // pred_region
            %s305 = sld [smem:[#allocation6]]
            %s306 = scalar_lea.smem [#allocation8], 0
            %307 = sst [smem:[%s306]] %s305
            %v308 = vld [vmem:[#allocation4] sm:$0xff]
            %309 = vadd.xlane.f32.xlu0 %v308
            %v310 = vpop.xlane.xlu0 %309
            %v311 = vrot.slane %v310, 4
            %v312 = vadd.f32 %v310, %v311
            %v313 = vrot.slane %v312, 2
            %v314 = vadd.f32 %v312, %v313
            %v315 = vrot.slane %v314, 1
            %v316 = vadd.f32 %v314, %v315
            %s317 = vtos %v316
            %s318 = scalar_lea.smem [#allocation8], 1
            %319 = sst [smem:[%s318]] %s317
            %v320 = vld [vmem:[#allocation5] sm:$0xff]
            %321 = vadd.xlane.f32.xlu0 %v320
            %v322 = vpop.xlane.xlu0 %321
            %v323 = vrot.slane %v322, 4
            %v324 = vadd.f32 %v322, %v323
            %v325 = vrot.slane %v324, 2
            %v326 = vadd.f32 %v324, %v325
            %v327 = vrot.slane %v326, 1
            %v328 = vadd.f32 %v326, %v327
            %s329 = vtos %v328
            %s330 = scalar_lea.smem [#allocation8], 2
            %331 = sst [smem:[%s330]] %s329
          $region52: #{berhu_loss.1} parent=47 // pred_fallthru
            _
        $region48: #{berhu_loss.1} parent=31 // pred_fallthru
          _
        // Predicated region
        $region53: #{berhu_loss.1} parent=31 // pred_check
          %p332 = pneg %p122
        $region54: #{berhu_loss.1} parent=31 // pred_check_branch
          %334 = sbr.rel (%p332) target = $region56
        $region55: #{berhu_loss.1} parent=31 // pred_region
          %s336 = ssub.s32 16, 16
          %337 = vsyncadd [#allocation9], %s336
          %s339 = sshll.u32 %s3, 4
          %s340 = int_to_ptr.vmem [resolvable:$true] %s339
          %342 = dma.smem_to_vmem [#allocation8], 16, %s340, [#allocation9]
        $region56: #{berhu_loss.1} parent=31 // pred_fallthru
          _
        // Predicated region
        $region57: #{berhu_loss.1} parent=31 // pred_check
          %p343 = pneg %p122
        $region58: #{berhu_loss.1} parent=31 // pred_check_branch
          %345 = sbr.rel (%p343) target = $region60
        $region59: #{berhu_loss.1} parent=31 // pred_region
          %346 = dma.done [#allocation9], 16
        $region60: #{berhu_loss.1} parent=31 // pred_fallthru
          _
        %347 = sfence
      $region32: #{berhu_loss.1} parent=5 // pred_fallthru
        _
      %p348 = scmp.le.s32.totalorder 2, %s11
      // Predicated region
      $region61: #{berhu_loss.1} parent=5 // pred_check
        %p349 = pneg %p348
      $region62: #{berhu_loss.1} parent=5 // pred_check_branch
        %351 = sbr.rel (%p349) target = $region64
      $region63: #{berhu_loss.1} parent=5 // pred_region
        %s352 = ssub.s32 %s11, 2
      $region64: #{berhu_loss.1} parent=5 // pred_fallthru
        _
    $region6: #{berhu_loss.1} parent=1 // loop_footer
      %s15 = sadd.s32 1, %s11
    $region7: #{berhu_loss.1} parent=1 // loop_footer_branch
      %10 = sbr.rel target = $region3
    $region8: #{berhu_loss.1} parent=1 // loop_exit
      _
    %353 = vsyncpa [#allocation9], 1
    %s354 = scalar_lea.sflag [#allocation9], 1
    %355 = vsyncpa %s354, 1

</llo_original>
